<compile_context>
chip_gen: v7x
topology: tpu7x:2x2x1
jax: 0.10.0
libtpu: 0.0.40
codegen_flags: <defaults>
</compile_context>

<pallas_src>
import string

import jax
import jax.numpy as jnp
from jax.experimental import pallas as pl
from jax.experimental.pallas import tpu as pltpu


def rnn_kernel(x_ref, w_ih_ref, w_hh_ref, bias_ref, w_fc_ref, b_fc_ref,
               out_ref):
    """One batch block.

    x_ref:    (T, BLK_B, Ip)  time-major, zero-padded input slab
    w_ih_ref: (Ip, Hp)   w_hh_ref: (Hp, Hp)   bias_ref: (1, Hp)
    w_fc_ref: (Hp, Cp)   b_fc_ref: (1, Cp)    out_ref:  (BLK_B, Cp)
    """
    T, BLK_B, Ip = x_ref.shape
    Hp = w_hh_ref.shape[0]

    # --- hoisted input projection: ONE big MXU matmul over all timesteps ----
    # Reshape is copy-free: BLK_B % 8 == 0 and Ip % 128 == 0.
    x2d = x_ref[...].reshape(T * BLK_B, Ip)
    pre = (jnp.dot(x2d, w_ih_ref[...], preferred_element_type=jnp.float32)
           + bias_ref[...])                                   # (T*BLK_B, Hp)
    pre = pre.reshape(T, BLK_B, Hp)     # time-major: pre[t] is one aligned tile

    # --- serial recurrence: h lives in vregs, static unroll (T small) -------
    w_hh = w_hh_ref[...]
    h = jnp.tanh(pre[0])                                      # h_{-1} = 0
    for t in range(1, T):
        h = jnp.tanh(pre[t]
                     + jnp.dot(h, w_hh, preferred_element_type=jnp.float32))

    # --- final linear on the last hidden state -------------------------------
    out_ref[...] = (jnp.dot(h, w_fc_ref[...],
                            preferred_element_type=jnp.float32)
                    + b_fc_ref[...])


def _round_up(n, m):
    return (n + m - 1) // m * m


def pad_params(params):
    """Zero-pad weights once to vreg/MXU-friendly shapes.

    INVARIANT (required for correctness of the padded recurrence): padded
    rows/cols of W_ih / W_hh / W_fc and padded bias entries are ZERO, and
    tanh(0) == 0, so padded hidden columns remain exactly 0 for all t and
    never feed back into the real state.
    """
    w_ih, w_hh, b_ih, b_hh, w_fc, b_fc = params
    I, H = w_ih.shape
    C = w_fc.shape[1]
    Ip, Hp, Cp = _round_up(I, 128), _round_up(H, 128), _round_up(C, 128)
    f32 = jnp.float32
    w_ih_p = jnp.zeros((Ip, Hp), f32).at[:I, :H].set(w_ih.astype(f32))
    w_hh_p = jnp.zeros((Hp, Hp), f32).at[:H, :H].set(w_hh.astype(f32))
    bias_p = jnp.zeros((1, Hp), f32).at[0, :H].set((b_ih + b_hh).astype(f32))
    w_fc_p = jnp.zeros((Hp, Cp), f32).at[:H, :C].set(w_fc.astype(f32))
    b_fc_p = jnp.zeros((1, Cp), f32).at[0, :C].set(b_fc.astype(f32))
    return (w_ih_p, w_hh_p, bias_p, w_fc_p, b_fc_p), (I, H, C)


def make_rnn_forward(params, *, blk_b=8):
    """Pad params once, return a jitted forward: x (B, T, I) -> (B, n_country)."""
    padded, (I, H, C) = pad_params(params)          # done once, reused per call
    w_ih_p, w_hh_p, bias_p, w_fc_p, b_fc_p = padded
    Ip, Hp = w_ih_p.shape
    Cp = w_fc_p.shape[1]
    BLK_B = blk_b

    @jax.jit
    def forward(x):
        B, T, _ = x.shape
        Bp = _round_up(max(B, BLK_B), BLK_B)

        # Time-major, zero-padded input: (T, Bp, Ip).  Transpose fuses under jit.
        x_p = jnp.zeros((T, Bp, Ip), jnp.float32)
        x_p = x_p.at[:, :B, :I].set(
            jnp.transpose(x.astype(jnp.float32), (1, 0, 2)))

        out_p = pl.pallas_call(
            rnn_kernel,
            out_shape=jax.ShapeDtypeStruct((Bp, Cp), jnp.float32),
            grid_spec=pltpu.PrefetchScalarGridSpec(
                num_scalar_prefetch=0,
                grid=(Bp // BLK_B,),
                in_specs=[
                    pl.BlockSpec((T, BLK_B, Ip), lambda b: (0, b, 0)),
                    pl.BlockSpec((Ip, Hp), lambda b: (0, 0)),
                    pl.BlockSpec((Hp, Hp), lambda b: (0, 0)),
                    pl.BlockSpec((1, Hp), lambda b: (0, 0)),
                    pl.BlockSpec((Hp, Cp), lambda b: (0, 0)),
                    pl.BlockSpec((1, Cp), lambda b: (0, 0)),
                ],
                out_specs=pl.BlockSpec((BLK_B, Cp), lambda b: (b, 0)),
            ),
            compiler_params=pltpu.CompilerParams(
                dimension_semantics=("parallel",)),
        )(x_p, w_ih_p, w_hh_p, bias_p, w_fc_p, b_fc_p)

        # Padded batch rows / class cols are wasted-but-correct work; slice off.
        return out_p[:B, :C]

    return forward


def rnn_reference(x, params):
    """Pure-JAX reference matching torch.nn.RNN(tanh) + Linear semantics."""
    w_ih, w_hh, b_ih, b_hh, w_fc, b_fc = params
    B, T, _ = x.shape
    H = w_hh.shape[0]
    h = jnp.zeros((B, H), jnp.float32)
    for t in range(T):
        h = jnp.tanh(x[:, t, :] @ w_ih + h @ w_hh + b_ih + b_hh)
    return h @ w_fc + b_fc


def init_params(key, n_letters, n_country):
    """Deterministic init mirroring PyTorch's U(-1/sqrt(H), 1/sqrt(H)) scheme.

    Weights are stored pre-transposed relative to PyTorch:
      w_ih: (I, H), w_hh: (H, H), w_fc: (H, C).
    """
    H = 2 * n_letters
    bound = 1.0 / jnp.sqrt(jnp.float32(H))
    ks = jax.random.split(key, 6)
    w_ih = jax.random.uniform(ks[0], (n_letters, H), jnp.float32, -bound, bound)
    w_hh = jax.random.uniform(ks[1], (H, H), jnp.float32, -bound, bound)
    b_ih = jax.random.uniform(ks[2], (H,), jnp.float32, -bound, bound)
    b_hh = jax.random.uniform(ks[3], (H,), jnp.float32, -bound, bound)
    w_fc = jax.random.uniform(ks[4], (H, n_country), jnp.float32, -bound, bound)
    b_fc = jax.random.uniform(ks[5], (n_country,), jnp.float32, -bound, bound)
    return (w_ih, w_hh, b_ih, b_hh, w_fc, b_fc)


if __name__ == "__main__":
    all_letters = string.ascii_letters + " .,;'"
    n_letters = len(all_letters)          # 57 (input size; hidden = 114)
    n_country = 18
    B, T = 2, 8

    key = jax.random.PRNGKey(0)
    k_x, k_p = jax.random.split(key)
    x = jax.random.normal(k_x, (B, T, n_letters), jnp.float32)
    params = init_params(k_p, n_letters, n_country)

    forward = make_rnn_forward(params)    # pads weights once, jits the call path
    out = forward(x)
    out = jax.block_until_ready(out)

    ref = rnn_reference(x, params)
    assert out.shape == (B, n_country), out.shape
    assert jnp.allclose(out, ref, atol=1e-4, rtol=1e-4), (
        float(jnp.max(jnp.abs(out - ref))))

    print("KERNEL_OK")
</pallas_src>

<mosaic_0001>
module attributes {stable_mosaic.version = 11 : i64} {
  func.func @rnn_kernel(%arg0: i32, %arg1: memref<8x8x128xf32, #tpu.memory_space<vmem>>, %arg2: memref<128x128xf32, #tpu.memory_space<vmem>>, %arg3: memref<128x128xf32, #tpu.memory_space<vmem>>, %arg4: memref<1x128xf32, #tpu.memory_space<vmem>>, %arg5: memref<128x128xf32, #tpu.memory_space<vmem>>, %arg6: memref<1x128xf32, #tpu.memory_space<vmem>>, %arg7: memref<8x128xf32, #tpu.memory_space<vmem>>) attributes {dimension_semantics = [#tpu.dimension_semantics<parallel>], iteration_bounds = array<i64: 1>, scalar_prefetch = 0 : i64, scratch_operands = 0 : i64, tpu.core_type = #tpu.core_type<tc>, window_params = [{transform_indices = @transform_0, window_bounds = array<i64: 8, 8, 128>}, {pipeline_mode = #tpu.pipeline_mode<synchronous>, transform_indices = @transform_1, window_bounds = array<i64: 128, 128>}, {pipeline_mode = #tpu.pipeline_mode<synchronous>, transform_indices = @transform_2, window_bounds = array<i64: 128, 128>}, {pipeline_mode = #tpu.pipeline_mode<synchronous>, transform_indices = @transform_3, window_bounds = array<i64: 1, 128>}, {pipeline_mode = #tpu.pipeline_mode<synchronous>, transform_indices = @transform_4, window_bounds = array<i64: 128, 128>}, {pipeline_mode = #tpu.pipeline_mode<synchronous>, transform_indices = @transform_5, window_bounds = array<i64: 1, 128>}, {transform_indices = @transform_6, window_bounds = array<i64: 8, 128>}]} {
    %c0 = arith.constant 0 : index
    %c0_0 = arith.constant 0 : index
    %c0_1 = arith.constant 0 : index
    %0 = vector.load %arg1[%c0, %c0_0, %c0_1] : memref<8x8x128xf32, #tpu.memory_space<vmem>>, vector<8x8x128xf32>
    %1 = vector.shape_cast %0 : vector<8x8x128xf32> to vector<64x128xf32>
    %c0_2 = arith.constant 0 : index
    %c0_3 = arith.constant 0 : index
    %2 = vector.load %arg2[%c0_2, %c0_3] : memref<128x128xf32, #tpu.memory_space<vmem>>, vector<128x128xf32>
    %cst = arith.constant dense<0.000000e+00> : vector<64x128xf32>
    %3 = tpu.matmul %1, %2, %cst {dimension_numbers = #tpu.dot_dimension_numbers<[1], [0], [0], [1], [0, 0, 1, 1], [], []>} : vector<64x128xf32>, vector<128x128xf32>, vector<64x128xf32> -> vector<64x128xf32>
    %c0_4 = arith.constant 0 : index
    %c0_5 = arith.constant 0 : index
    %4 = vector.load %arg4[%c0_4, %c0_5] : memref<1x128xf32, #tpu.memory_space<vmem>>, vector<1x128xf32>
    %5 = vector.broadcast %4 : vector<1x128xf32> to vector<64x128xf32>
    %6 = arith.addf %3, %5 : vector<64x128xf32>
    %7 = vector.shape_cast %6 : vector<64x128xf32> to vector<8x8x128xf32>
    %c0_6 = arith.constant 0 : index
    %c0_7 = arith.constant 0 : index
    %8 = vector.load %arg3[%c0_6, %c0_7] : memref<128x128xf32, #tpu.memory_space<vmem>>, vector<128x128xf32>
    %9 = vector.extract_strided_slice %7 {offsets = [0, 0, 0], sizes = [1, 8, 128], strides = [1, 1, 1]} : vector<8x8x128xf32> to vector<1x8x128xf32>
    %10 = vector.shape_cast %9 : vector<1x8x128xf32> to vector<8x128xf32>
    %11 = math.tanh %10 : vector<8x128xf32>
    %12 = vector.extract_strided_slice %7 {offsets = [1, 0, 0], sizes = [1, 8, 128], strides = [1, 1, 1]} : vector<8x8x128xf32> to vector<1x8x128xf32>
    %13 = vector.shape_cast %12 : vector<1x8x128xf32> to vector<8x128xf32>
    %cst_8 = arith.constant dense<0.000000e+00> : vector<8x128xf32>
    %14 = tpu.matmul %11, %8, %cst_8 {dimension_numbers = #tpu.dot_dimension_numbers<[1], [0], [0], [1], [0, 0, 1, 1], [], []>} : vector<8x128xf32>, vector<128x128xf32>, vector<8x128xf32> -> vector<8x128xf32>
    %15 = arith.addf %13, %14 : vector<8x128xf32>
    %16 = math.tanh %15 : vector<8x128xf32>
    %17 = vector.extract_strided_slice %7 {offsets = [2, 0, 0], sizes = [1, 8, 128], strides = [1, 1, 1]} : vector<8x8x128xf32> to vector<1x8x128xf32>
    %18 = vector.shape_cast %17 : vector<1x8x128xf32> to vector<8x128xf32>
    %cst_9 = arith.constant dense<0.000000e+00> : vector<8x128xf32>
    %19 = tpu.matmul %16, %8, %cst_9 {dimension_numbers = #tpu.dot_dimension_numbers<[1], [0], [0], [1], [0, 0, 1, 1], [], []>} : vector<8x128xf32>, vector<128x128xf32>, vector<8x128xf32> -> vector<8x128xf32>
    %20 = arith.addf %18, %19 : vector<8x128xf32>
    %21 = math.tanh %20 : vector<8x128xf32>
    %22 = vector.extract_strided_slice %7 {offsets = [3, 0, 0], sizes = [1, 8, 128], strides = [1, 1, 1]} : vector<8x8x128xf32> to vector<1x8x128xf32>
    %23 = vector.shape_cast %22 : vector<1x8x128xf32> to vector<8x128xf32>
    %cst_10 = arith.constant dense<0.000000e+00> : vector<8x128xf32>
    %24 = tpu.matmul %21, %8, %cst_10 {dimension_numbers = #tpu.dot_dimension_numbers<[1], [0], [0], [1], [0, 0, 1, 1], [], []>} : vector<8x128xf32>, vector<128x128xf32>, vector<8x128xf32> -> vector<8x128xf32>
    %25 = arith.addf %23, %24 : vector<8x128xf32>
    %26 = math.tanh %25 : vector<8x128xf32>
    %27 = vector.extract_strided_slice %7 {offsets = [4, 0, 0], sizes = [1, 8, 128], strides = [1, 1, 1]} : vector<8x8x128xf32> to vector<1x8x128xf32>
    %28 = vector.shape_cast %27 : vector<1x8x128xf32> to vector<8x128xf32>
    %cst_11 = arith.constant dense<0.000000e+00> : vector<8x128xf32>
    %29 = tpu.matmul %26, %8, %cst_11 {dimension_numbers = #tpu.dot_dimension_numbers<[1], [0], [0], [1], [0, 0, 1, 1], [], []>} : vector<8x128xf32>, vector<128x128xf32>, vector<8x128xf32> -> vector<8x128xf32>
    %30 = arith.addf %28, %29 : vector<8x128xf32>
    %31 = math.tanh %30 : vector<8x128xf32>
    %32 = vector.extract_strided_slice %7 {offsets = [5, 0, 0], sizes = [1, 8, 128], strides = [1, 1, 1]} : vector<8x8x128xf32> to vector<1x8x128xf32>
    %33 = vector.shape_cast %32 : vector<1x8x128xf32> to vector<8x128xf32>
    %cst_12 = arith.constant dense<0.000000e+00> : vector<8x128xf32>
    %34 = tpu.matmul %31, %8, %cst_12 {dimension_numbers = #tpu.dot_dimension_numbers<[1], [0], [0], [1], [0, 0, 1, 1], [], []>} : vector<8x128xf32>, vector<128x128xf32>, vector<8x128xf32> -> vector<8x128xf32>
    %35 = arith.addf %33, %34 : vector<8x128xf32>
    %36 = math.tanh %35 : vector<8x128xf32>
    %37 = vector.extract_strided_slice %7 {offsets = [6, 0, 0], sizes = [1, 8, 128], strides = [1, 1, 1]} : vector<8x8x128xf32> to vector<1x8x128xf32>
    %38 = vector.shape_cast %37 : vector<1x8x128xf32> to vector<8x128xf32>
    %cst_13 = arith.constant dense<0.000000e+00> : vector<8x128xf32>
    %39 = tpu.matmul %36, %8, %cst_13 {dimension_numbers = #tpu.dot_dimension_numbers<[1], [0], [0], [1], [0, 0, 1, 1], [], []>} : vector<8x128xf32>, vector<128x128xf32>, vector<8x128xf32> -> vector<8x128xf32>
    %40 = arith.addf %38, %39 : vector<8x128xf32>
    %41 = math.tanh %40 : vector<8x128xf32>
    %42 = vector.extract_strided_slice %7 {offsets = [7, 0, 0], sizes = [1, 8, 128], strides = [1, 1, 1]} : vector<8x8x128xf32> to vector<1x8x128xf32>
    %43 = vector.shape_cast %42 : vector<1x8x128xf32> to vector<8x128xf32>
    %cst_14 = arith.constant dense<0.000000e+00> : vector<8x128xf32>
    %44 = tpu.matmul %41, %8, %cst_14 {dimension_numbers = #tpu.dot_dimension_numbers<[1], [0], [0], [1], [0, 0, 1, 1], [], []>} : vector<8x128xf32>, vector<128x128xf32>, vector<8x128xf32> -> vector<8x128xf32>
    %45 = arith.addf %43, %44 : vector<8x128xf32>
    %46 = math.tanh %45 : vector<8x128xf32>
    %c0_15 = arith.constant 0 : index
    %c0_16 = arith.constant 0 : index
    %47 = vector.load %arg5[%c0_15, %c0_16] : memref<128x128xf32, #tpu.memory_space<vmem>>, vector<128x128xf32>
    %cst_17 = arith.constant dense<0.000000e+00> : vector<8x128xf32>
    %48 = tpu.matmul %46, %47, %cst_17 {dimension_numbers = #tpu.dot_dimension_numbers<[1], [0], [0], [1], [0, 0, 1, 1], [], []>} : vector<8x128xf32>, vector<128x128xf32>, vector<8x128xf32> -> vector<8x128xf32>
    %c0_18 = arith.constant 0 : index
    %c0_19 = arith.constant 0 : index
    %49 = vector.load %arg6[%c0_18, %c0_19] : memref<1x128xf32, #tpu.memory_space<vmem>>, vector<1x128xf32>
    %50 = vector.broadcast %49 : vector<1x128xf32> to vector<8x128xf32>
    %51 = arith.addf %48, %50 : vector<8x128xf32>
    %c0_20 = arith.constant 0 : index
    %c0_21 = arith.constant 0 : index
    %52 = vector.load %arg7[%c0_20, %c0_21] : memref<8x128xf32, #tpu.memory_space<vmem>>, vector<8x128xf32>
    tpu.vector_store %arg7[%c0_20, %c0_21], %51 {strides = array<i32>} : memref<8x128xf32, #tpu.memory_space<vmem>>, vector<8x128xf32>,
    return
  }
  func.func @transform_0(%arg0: i32) -> (i32, i32, i32) {
    %c0_i32 = arith.constant 0 : i32
    %c0_i32_0 = arith.constant 0 : i32
    %c0_i32_1 = arith.constant 0 : i32
    return %c0_i32, %arg0, %c0_i32_0 : i32, i32, i32
  }
  func.func @transform_1(%arg0: i32) -> (i32, i32) {
    %c0_i32 = arith.constant 0 : i32
    %c0_i32_0 = arith.constant 0 : i32
    %c0_i32_1 = arith.constant 0 : i32
    return %c0_i32, %c0_i32_0 : i32, i32
  }
  func.func @transform_2(%arg0: i32) -> (i32, i32) {
    %c0_i32 = arith.constant 0 : i32
    %c0_i32_0 = arith.constant 0 : i32
    %c0_i32_1 = arith.constant 0 : i32
    return %c0_i32, %c0_i32_0 : i32, i32
  }
  func.func @transform_3(%arg0: i32) -> (i32, i32) {
    %c0_i32 = arith.constant 0 : i32
    %c0_i32_0 = arith.constant 0 : i32
    %c0_i32_1 = arith.constant 0 : i32
    return %c0_i32, %c0_i32_0 : i32, i32
  }
  func.func @transform_4(%arg0: i32) -> (i32, i32) {
    %c0_i32 = arith.constant 0 : i32
    %c0_i32_0 = arith.constant 0 : i32
    %c0_i32_1 = arith.constant 0 : i32
    return %c0_i32, %c0_i32_0 : i32, i32
  }
  func.func @transform_5(%arg0: i32) -> (i32, i32) {
    %c0_i32 = arith.constant 0 : i32
    %c0_i32_0 = arith.constant 0 : i32
    %c0_i32_1 = arith.constant 0 : i32
    return %c0_i32, %c0_i32_0 : i32, i32
  }
  func.func @transform_6(%arg0: i32) -> (i32, i32) {
    %c0_i32 = arith.constant 0 : i32
    %c0_i32_0 = arith.constant 0 : i32
    return %arg0, %c0_i32 : i32, i32
  }
}

</mosaic_0001>

<llo_original>
// kernel: forward.1
$region0: #{forward.1}
  #allocation0 [shape = 'u32[]', space=smem, size = 0x4, offset = 0x4, fixed_abs, tag = 'smem constant byte address 0x4 - core index']
  #allocation1 [shape = 'u32[144,128]{1,0:T(1,128)}', space=vmem, size = 0x12000, scoped, tag = 'internal scratch']
  %s0 = inlined_call_operand.vmem [shape: f32[8,8,128], index: 0, kind: input, shape index: {}]
  %s1 = inlined_call_operand.hbm [shape: f32[128,128], index: 1, kind: input, shape index: {}]
  %s2 = inlined_call_operand.hbm [shape: f32[128,128], index: 2, kind: input, shape index: {}]
  %s3 = inlined_call_operand.hbm [shape: f32[1,128], index: 3, kind: input, shape index: {}]
  %s4 = inlined_call_operand.vmem [shape: f32[128,128], index: 4, kind: input, shape index: {}]
  %s5 = inlined_call_operand.vmem [shape: f32[1,128], index: 5, kind: input, shape index: {}]
  %s6 = inlined_call_operand.vmem [shape: f32[8,128], index: 6, kind: output, shape index: {}]
  %s7 = sld [smem:[#allocation0]]
  $region46: #{forward.1} parent=0
    _
  %s9 = ssub.s32 1, %s7
  %s10 = scalar_select 0, %s9, %s7
  $region1: #{forward.1} parent=0
    #allocation2 [shape = 'u8[65536]{0}', space=vmem, size = 0x10000, scoped, tag = 'input window, operand 1, single buffered']
    #allocation3 [shape = 's32[1]{0}', space=sflag, size = 0x4, scoped, tag = 'scoped memory for forward.1']
    #allocation4 [shape = 'u8[65536]{0}', space=vmem, size = 0x10000, scoped, tag = 'input window, operand 2, single buffered']
    #allocation5 [shape = 's32[1]{0}', space=sflag, size = 0x4, scoped, tag = 'scoped memory for forward.1']
    #allocation6 [shape = 'u8[512]{0}', space=vmem, size = 0x400, scoped, tag = 'input window, operand 3, single buffered']
    %11 = vsyncpa [#allocation3], 0
    %12 = vsyncpa [#allocation5], 0
    // Predicated region
    $region2: #{forward.1} parent=1 // pred_check
      _
    $region3: #{forward.1} parent=1 // pred_check_branch
      %14 = sbr.rel (0) target = $region5
    $region4: #{forward.1} parent=1 // pred_region
      _
    $region5: #{forward.1} parent=1 // pred_fallthru
      _
    // Predicated region
    $region6: #{forward.1} parent=1 // pred_check
      _
    $region7: #{forward.1} parent=1 // pred_check_branch
      %16 = sbr.rel (0) target = $region9
    $region8: #{forward.1} parent=1 // pred_region
      %s18 = ssub.s32 2048, 2048
      %19 = vsyncadd [#allocation3], %s18
      %s20 = sshll.u32 [#allocation2], 4
      %s21 = int_to_ptr.vmem [resolvable:$true] %s20
      %26 = dma.hbm_to_vmem [thread:$0]  %s1, 2048, %s21, [#allocation3], 128, 128, 8
    $region9: #{forward.1} parent=1 // pred_fallthru
      _
    // Predicated region
    $region10: #{forward.1} parent=1 // pred_check
      _
    $region11: #{forward.1} parent=1 // pred_check_branch
      %28 = sbr.rel (0) target = $region13
    $region12: #{forward.1} parent=1 // pred_region
      %s30 = ssub.s32 2048, 2048
      %31 = vsyncadd [#allocation5], %s30
      %s32 = sshll.u32 [#allocation4], 4
      %s33 = int_to_ptr.vmem [resolvable:$true] %s32
      %38 = dma.hbm_to_vmem [thread:$0]  %s2, 2048, %s33, [#allocation5], 128, 128, 8
    $region13: #{forward.1} parent=1 // pred_fallthru
      _
    // Predicated region
    $region14: #{forward.1} parent=1 // pred_check
      _
    $region15: #{forward.1} parent=1 // pred_check_branch
      %40 = sbr.rel (0) target = $region17
    $region16: #{forward.1} parent=1 // pred_region
      %s42 = ssub.s32 16, 16
      %43 = vsyncadd [#allocation5], %s42
      %s45 = sshll.u32 [#allocation6], 4
      %s46 = int_to_ptr.vmem [resolvable:$true] %s45
      %48 = dma.hbm_to_vmem [thread:$0]  %s3, 16, %s46, [#allocation5]
    $region17: #{forward.1} parent=1 // pred_fallthru
      _
    // Predicated region
    $region18: #{forward.1} parent=1 // pred_check
      _
    $region19: #{forward.1} parent=1 // pred_check_branch
      %50 = sbr.rel (0) target = $region21
    $region20: #{forward.1} parent=1 // pred_region
      _
    $region21: #{forward.1} parent=1 // pred_fallthru
      _
    // Predicated region
    $region22: #{forward.1} parent=1 // pred_check
      _
    $region23: #{forward.1} parent=1 // pred_check_branch
      %52 = sbr.rel (0) target = $region25
    $region24: #{forward.1} parent=1 // pred_region
      _
    $region25: #{forward.1} parent=1 // pred_fallthru
      _
    // Predicated region
    $region26: #{forward.1} parent=1 // pred_check
      _
    $region27: #{forward.1} parent=1 // pred_check_branch
      %54 = sbr.rel (0) target = $region29
    $region28: #{forward.1} parent=1 // pred_region
      %55 = dma.done [#allocation3], 2048
    $region29: #{forward.1} parent=1 // pred_fallthru
      _
    // Predicated region
    $region30: #{forward.1} parent=1 // pred_check
      _
    $region31: #{forward.1} parent=1 // pred_check_branch
      %57 = sbr.rel (0) target = $region33
    $region32: #{forward.1} parent=1 // pred_region
      %58 = dma.done [#allocation5], 2048
    $region33: #{forward.1} parent=1 // pred_fallthru
      _
    // Predicated region
    $region34: #{forward.1} parent=1 // pred_check
      _
    $region35: #{forward.1} parent=1 // pred_check_branch
      %60 = sbr.rel (0) target = $region37
    $region36: #{forward.1} parent=1 // pred_region
      %61 = dma.done [#allocation5], 16
    $region37: #{forward.1} parent=1 // pred_fallthru
      _
    %v62 = vld [vmem:[%s0] sm:$0xff]
    %v63 = vld [vmem:[%s0 + $0x8] sm:$0xff]
    %v64 = vld [vmem:[%s0 + $0x10] sm:$0xff]
    %v65 = vld [vmem:[%s0 + $0x18] sm:$0xff]
    %v66 = vld [vmem:[%s0 + $0x20] sm:$0xff]
    %v67 = vld [vmem:[%s0 + $0x28] sm:$0xff]
    %v68 = vld [vmem:[%s0 + $0x30] sm:$0xff]
    %v69 = vld [vmem:[%s0 + $0x38] sm:$0xff]
    %v70 = vld [vmem:[#allocation2] sm:$0xff]
    %v71 = vld [vmem:[#allocation2 + $0x8] sm:$0xff]
    %v72 = vld [vmem:[#allocation2 + $0x10] sm:$0xff]
    %v73 = vld [vmem:[#allocation2 + $0x18] sm:$0xff]
    %v74 = vld [vmem:[#allocation2 + $0x20] sm:$0xff]
    %v75 = vld [vmem:[#allocation2 + $0x28] sm:$0xff]
    %v76 = vld [vmem:[#allocation2 + $0x30] sm:$0xff]
    %v77 = vld [vmem:[#allocation2 + $0x38] sm:$0xff]
    %v78 = vld [vmem:[#allocation2 + $0x40] sm:$0xff]
    %v79 = vld [vmem:[#allocation2 + $0x48] sm:$0xff]
    %v80 = vld [vmem:[#allocation2 + $0x50] sm:$0xff]
    %v81 = vld [vmem:[#allocation2 + $0x58] sm:$0xff]
    %v82 = vld [vmem:[#allocation2 + $0x60] sm:$0xff]
    %v83 = vld [vmem:[#allocation2 + $0x68] sm:$0xff]
    %v84 = vld [vmem:[#allocation2 + $0x70] sm:$0xff]
    %v85 = vld [vmem:[#allocation2 + $0x78] sm:$0xff]
    %v86 = vld [vmem:[#allocation6] sm:$0x1]
    %v88 = vlaneseq
    %v89 = vshrl.u32 %v88, 7
    %v90 = vsub.s32 0, %v89
    %v91 = vrot.slane %v86, %v90
    %93 = vmatprep.subr.mxu0 0.0
    %94 = vmatpush1.msra.mxu0 %v70
    %95 = vmatprep.subr.mxu0 0.0
    %96 = vmatpush1.msra.mxu0 %v71
    %97 = vmatprep.subr.mxu0 0.0
    %98 = vmatpush1.msra.mxu0 %v72
    %99 = vmatprep.subr.mxu0 0.0
    %100 = vmatpush1.msra.mxu0 %v73
    %101 = vmatprep.subr.mxu0 0.0
    %102 = vmatpush1.msra.mxu0 %v74
    %103 = vmatprep.subr.mxu0 0.0
    %104 = vmatpush1.msra.mxu0 %v75
    %105 = vmatprep.subr.mxu0 0.0
    %106 = vmatpush1.msra.mxu0 %v76
    %107 = vmatprep.subr.mxu0 0.0
    %108 = vmatpush1.msra.mxu0 %v77
    %109 = vmatprep.subr.mxu0 0.0
    %110 = vmatpush1.msra.mxu0 %v78
    %111 = vmatprep.subr.mxu0 0.0
    %112 = vmatpush1.msra.mxu0 %v79
    %113 = vmatprep.subr.mxu0 0.0
    %114 = vmatpush1.msra.mxu0 %v80
    %115 = vmatprep.subr.mxu0 0.0
    %116 = vmatpush1.msra.mxu0 %v81
    %117 = vmatprep.subr.mxu0 0.0
    %118 = vmatpush1.msra.mxu0 %v82
    %119 = vmatprep.subr.mxu0 0.0
    %120 = vmatpush1.msra.mxu0 %v83
    %121 = vmatprep.subr.mxu0 0.0
    %122 = vmatpush1.msra.mxu0 %v84
    %123 = vmatprep.subr.mxu0 0.0
    %124 = vmatpush1.msra.mxu0 %v85
    %125 = vmatprep.subr.mxu0 0.0
    %126 = vmatpush1.msra.mxu0 0.0
    %127 = vmatprep.subr.mxu0 0.0
    %128 = vmatpush1.msra.mxu0 0.0
    %129 = vmatprep.subr.mxu0 0.0
    %130 = vmatpush1.msra.mxu0 0.0
    %131 = vmatprep.subr.mxu0 0.0
    %132 = vmatpush1.msra.mxu0 0.0
    %133 = vmatprep.subr.mxu0 0.0
    %134 = vmatpush1.msra.mxu0 0.0
    %135 = vmatprep.subr.mxu0 0.0
    %136 = vmatpush1.msra.mxu0 0.0
    %137 = vmatprep.subr.mxu0 0.0
    %138 = vmatpush1.msra.mxu0 0.0
    %139 = vmatprep.subr.mxu0 0.0
    %140 = vmatpush1.msra.mxu0 0.0
    %141 = vmatprep.subr.mxu0 0.0
    %142 = vmatpush1.msra.mxu0 0.0
    %143 = vmatprep.subr.mxu0 0.0
    %144 = vmatpush1.msra.mxu0 0.0
    %145 = vmatprep.subr.mxu0 0.0
    %146 = vmatpush1.msra.mxu0 0.0
    %147 = vmatprep.subr.mxu0 0.0
    %148 = vmatpush1.msra.mxu0 0.0
    %149 = vmatprep.subr.mxu0 0.0
    %150 = vmatpush1.msra.mxu0 0.0
    %151 = vmatprep.subr.mxu0 0.0
    %152 = vmatpush1.msra.mxu0 0.0
    %153 = vmatprep.subr.mxu0 0.0
    %154 = vmatpush1.msra.mxu0 0.0
    %155 = vmatprep.subr.mxu0 0.0
    %156 = vmatpush1.msra.mxu0 0.0
    %157 = vmatprep.mubr.f32.mxu0 0.0
    %158 = vmatmul.mubr.f32.gmra.mrb[0].mxu0 %v62
    %v159 = vpop.f32.mrb[0].mxu0
    %v160 = vadd.f32 %v91, %v159
    %v161 = vpop.f32.mrb[0].mxu0
    %162 = vmatprep.mubr.f32.mxu0 0.0
    %163 = vmatmul.mubr.f32.gmra.mrb[0].mxu0 %v63
    %v164 = vpop.f32.mrb[0].mxu0
    %v165 = vadd.f32 %v91, %v164
    %v166 = vpop.f32.mrb[0].mxu0
    %167 = vmatprep.mubr.f32.mxu0 0.0
    %168 = vmatmul.mubr.f32.gmra.mrb[0].mxu0 %v64
    %v169 = vpop.f32.mrb[0].mxu0
    %v170 = vadd.f32 %v91, %v169
    %v171 = vpop.f32.mrb[0].mxu0
    %172 = vmatprep.mubr.f32.mxu0 0.0
    %173 = vmatmul.mubr.f32.gmra.mrb[0].mxu0 %v65
    %v174 = vpop.f32.mrb[0].mxu0
    %v175 = vadd.f32 %v91, %v174
    %v176 = vpop.f32.mrb[0].mxu0
    %177 = vmatprep.mubr.f32.mxu0 0.0
    %178 = vmatmul.mubr.f32.gmra.mrb[0].mxu0 %v66
    %v179 = vpop.f32.mrb[0].mxu0
    %v180 = vadd.f32 %v91, %v179
    %v181 = vpop.f32.mrb[0].mxu0
    %182 = vmatprep.mubr.f32.mxu0 0.0
    %183 = vmatmul.mubr.f32.gmra.mrb[0].mxu0 %v67
    %v184 = vpop.f32.mrb[0].mxu0
    %v185 = vadd.f32 %v91, %v184
    %v186 = vpop.f32.mrb[0].mxu0
    %187 = vmatprep.mubr.f32.mxu0 0.0
    %188 = vmatmul.mubr.f32.gmra.mrb[0].mxu0 %v68
    %v189 = vpop.f32.mrb[0].mxu0
    %v190 = vadd.f32 %v91, %v189
    %v191 = vpop.f32.mrb[0].mxu0
    %192 = vmatprep.mubr.f32.mxu0 0.0
    %193 = vmatmul.mubr.f32.gmra.mrb[0].mxu0 %v69
    %v194 = vpop.f32.mrb[0].mxu0
    %v195 = vadd.f32 %v91, %v194
    %v196 = vpop.f32.mrb[0].mxu0
    %197 = vdwg.mxu0
    %v198 = vld [vmem:[#allocation4] sm:$0xff]
    %v199 = vld [vmem:[#allocation4 + $0x8] sm:$0xff]
    %v200 = vld [vmem:[#allocation4 + $0x10] sm:$0xff]
    %v201 = vld [vmem:[#allocation4 + $0x18] sm:$0xff]
    %v202 = vld [vmem:[#allocation4 + $0x20] sm:$0xff]
    %v203 = vld [vmem:[#allocation4 + $0x28] sm:$0xff]
    %v204 = vld [vmem:[#allocation4 + $0x30] sm:$0xff]
    %v205 = vld [vmem:[#allocation4 + $0x38] sm:$0xff]
    %v206 = vld [vmem:[#allocation4 + $0x40] sm:$0xff]
    %v207 = vld [vmem:[#allocation4 + $0x48] sm:$0xff]
    %v208 = vld [vmem:[#allocation4 + $0x50] sm:$0xff]
    %v209 = vld [vmem:[#allocation4 + $0x58] sm:$0xff]
    %v210 = vld [vmem:[#allocation4 + $0x60] sm:$0xff]
    %v211 = vld [vmem:[#allocation4 + $0x68] sm:$0xff]
    %v212 = vld [vmem:[#allocation4 + $0x70] sm:$0xff]
    %v213 = vld [vmem:[#allocation4 + $0x78] sm:$0xff]
    %v214 = vtanh.pop %v160
    %215 = vmatprep.subr.mxu0 0.0
    %216 = vmatpush1.msra.mxu0 %v198
    %217 = vmatprep.subr.mxu0 0.0
    %218 = vmatpush1.msra.mxu0 %v199
    %219 = vmatprep.subr.mxu0 0.0
    %220 = vmatpush1.msra.mxu0 %v200
    %221 = vmatprep.subr.mxu0 0.0
    %222 = vmatpush1.msra.mxu0 %v201
    %223 = vmatprep.subr.mxu0 0.0
    %224 = vmatpush1.msra.mxu0 %v202
    %225 = vmatprep.subr.mxu0 0.0
    %226 = vmatpush1.msra.mxu0 %v203
    %227 = vmatprep.subr.mxu0 0.0
    %228 = vmatpush1.msra.mxu0 %v204
    %229 = vmatprep.subr.mxu0 0.0
    %230 = vmatpush1.msra.mxu0 %v205
    %231 = vmatprep.subr.mxu0 0.0
    %232 = vmatpush1.msra.mxu0 %v206
    %233 = vmatprep.subr.mxu0 0.0
    %234 = vmatpush1.msra.mxu0 %v207
    %235 = vmatprep.subr.mxu0 0.0
    %236 = vmatpush1.msra.mxu0 %v208
    %237 = vmatprep.subr.mxu0 0.0
    %238 = vmatpush1.msra.mxu0 %v209
    %239 = vmatprep.subr.mxu0 0.0
    %240 = vmatpush1.msra.mxu0 %v210
    %241 = vmatprep.subr.mxu0 0.0
    %242 = vmatpush1.msra.mxu0 %v211
    %243 = vmatprep.subr.mxu0 0.0
    %244 = vmatpush1.msra.mxu0 %v212
    %245 = vmatprep.subr.mxu0 0.0
    %246 = vmatpush1.msra.mxu0 %v213
    %247 = vmatprep.subr.mxu0 0.0
    %248 = vmatpush1.msra.mxu0 0.0
    %249 = vmatprep.subr.mxu0 0.0
    %250 = vmatpush1.msra.mxu0 0.0
    %251 = vmatprep.subr.mxu0 0.0
    %252 = vmatpush1.msra.mxu0 0.0
    %253 = vmatprep.subr.mxu0 0.0
    %254 = vmatpush1.msra.mxu0 0.0
    %255 = vmatprep.subr.mxu0 0.0
    %256 = vmatpush1.msra.mxu0 0.0
    %257 = vmatprep.subr.mxu0 0.0
    %258 = vmatpush1.msra.mxu0 0.0
    %259 = vmatprep.subr.mxu0 0.0
    %260 = vmatpush1.msra.mxu0 0.0
    %261 = vmatprep.subr.mxu0 0.0
    %262 = vmatpush1.msra.mxu0 0.0
    %263 = vmatprep.subr.mxu0 0.0
    %264 = vmatpush1.msra.mxu0 0.0
    %265 = vmatprep.subr.mxu0 0.0
    %266 = vmatpush1.msra.mxu0 0.0
    %267 = vmatprep.subr.mxu0 0.0
    %268 = vmatpush1.msra.mxu0 0.0
    %269 = vmatprep.subr.mxu0 0.0
    %270 = vmatpush1.msra.mxu0 0.0
    %271 = vmatprep.subr.mxu0 0.0
    %272 = vmatpush1.msra.mxu0 0.0
    %273 = vmatprep.subr.mxu0 0.0
    %274 = vmatpush1.msra.mxu0 0.0
    %275 = vmatprep.subr.mxu0 0.0
    %276 = vmatpush1.msra.mxu0 0.0
    %277 = vmatprep.subr.mxu0 0.0
    %278 = vmatpush1.msra.mxu0 0.0
    %279 = vmatprep.mubr.f32.mxu0 0.0
    %280 = vmatmul.mubr.f32.gmra.mrb[0].mxu0 %v214
    %v281 = vpop.f32.mrb[0].mxu0
    %v282 = vadd.f32 0.0, %v281
    %v283 = vpop.f32.mrb[0].mxu0
    %284 = vdwg.mxu0
    %v285 = vadd.f32 %v165, %v282
    %v286 = vtanh.pop %v285
    %287 = vmatprep.subr.mxu0 0.0
    %288 = vmatpush1.msra.mxu0 %v198
    %289 = vmatprep.subr.mxu0 0.0
    %290 = vmatpush1.msra.mxu0 %v199
    %291 = vmatprep.subr.mxu0 0.0
    %292 = vmatpush1.msra.mxu0 %v200
    %293 = vmatprep.subr.mxu0 0.0
    %294 = vmatpush1.msra.mxu0 %v201
    %295 = vmatprep.subr.mxu0 0.0
    %296 = vmatpush1.msra.mxu0 %v202
    %297 = vmatprep.subr.mxu0 0.0
    %298 = vmatpush1.msra.mxu0 %v203
    %299 = vmatprep.subr.mxu0 0.0
    %300 = vmatpush1.msra.mxu0 %v204
    %301 = vmatprep.subr.mxu0 0.0
    %302 = vmatpush1.msra.mxu0 %v205
    %303 = vmatprep.subr.mxu0 0.0
    %304 = vmatpush1.msra.mxu0 %v206
    %305 = vmatprep.subr.mxu0 0.0
    %306 = vmatpush1.msra.mxu0 %v207
    %307 = vmatprep.subr.mxu0 0.0
    %308 = vmatpush1.msra.mxu0 %v208
    %309 = vmatprep.subr.mxu0 0.0
    %310 = vmatpush1.msra.mxu0 %v209
    %311 = vmatprep.subr.mxu0 0.0
    %312 = vmatpush1.msra.mxu0 %v210
    %313 = vmatprep.subr.mxu0 0.0
    %314 = vmatpush1.msra.mxu0 %v211
    %315 = vmatprep.subr.mxu0 0.0
    %316 = vmatpush1.msra.mxu0 %v212
    %317 = vmatprep.subr.mxu0 0.0
    %318 = vmatpush1.msra.mxu0 %v213
    %319 = vmatprep.subr.mxu0 0.0
    %320 = vmatpush1.msra.mxu0 0.0
    %321 = vmatprep.subr.mxu0 0.0
    %322 = vmatpush1.msra.mxu0 0.0
    %323 = vmatprep.subr.mxu0 0.0
    %324 = vmatpush1.msra.mxu0 0.0
    %325 = vmatprep.subr.mxu0 0.0
    %326 = vmatpush1.msra.mxu0 0.0
    %327 = vmatprep.subr.mxu0 0.0
    %328 = vmatpush1.msra.mxu0 0.0
    %329 = vmatprep.subr.mxu0 0.0
    %330 = vmatpush1.msra.mxu0 0.0
    %331 = vmatprep.subr.mxu0 0.0
    %332 = vmatpush1.msra.mxu0 0.0
    %333 = vmatprep.subr.mxu0 0.0
    %334 = vmatpush1.msra.mxu0 0.0
    %335 = vmatprep.subr.mxu0 0.0
    %336 = vmatpush1.msra.mxu0 0.0
    %337 = vmatprep.subr.mxu0 0.0
    %338 = vmatpush1.msra.mxu0 0.0
    %339 = vmatprep.subr.mxu0 0.0
    %340 = vmatpush1.msra.mxu0 0.0
    %341 = vmatprep.subr.mxu0 0.0
    %342 = vmatpush1.msra.mxu0 0.0
    %343 = vmatprep.subr.mxu0 0.0
    %344 = vmatpush1.msra.mxu0 0.0
    %345 = vmatprep.subr.mxu0 0.0
    %346 = vmatpush1.msra.mxu0 0.0
    %347 = vmatprep.subr.mxu0 0.0
    %348 = vmatpush1.msra.mxu0 0.0
    %349 = vmatprep.subr.mxu0 0.0
    %350 = vmatpush1.msra.mxu0 0.0
    %351 = vmatprep.mubr.f32.mxu0 0.0
    %352 = vmatmul.mubr.f32.gmra.mrb[0].mxu0 %v286
    %v353 = vpop.f32.mrb[0].mxu0
    %v354 = vadd.f32 0.0, %v353
    %v355 = vpop.f32.mrb[0].mxu0
    %356 = vdwg.mxu0
    %v357 = vadd.f32 %v170, %v354
    %v358 = vtanh.pop %v357
    %359 = vmatprep.subr.mxu0 0.0
    %360 = vmatpush1.msra.mxu0 %v198
    %361 = vmatprep.subr.mxu0 0.0
    %362 = vmatpush1.msra.mxu0 %v199
    %363 = vmatprep.subr.mxu0 0.0
    %364 = vmatpush1.msra.mxu0 %v200
    %365 = vmatprep.subr.mxu0 0.0
    %366 = vmatpush1.msra.mxu0 %v201
    %367 = vmatprep.subr.mxu0 0.0
    %368 = vmatpush1.msra.mxu0 %v202
    %369 = vmatprep.subr.mxu0 0.0
    %370 = vmatpush1.msra.mxu0 %v203
    %371 = vmatprep.subr.mxu0 0.0
    %372 = vmatpush1.msra.mxu0 %v204
    %373 = vmatprep.subr.mxu0 0.0
    %374 = vmatpush1.msra.mxu0 %v205
    %375 = vmatprep.subr.mxu0 0.0
    %376 = vmatpush1.msra.mxu0 %v206
    %377 = vmatprep.subr.mxu0 0.0
    %378 = vmatpush1.msra.mxu0 %v207
    %379 = vmatprep.subr.mxu0 0.0
    %380 = vmatpush1.msra.mxu0 %v208
    %381 = vmatprep.subr.mxu0 0.0
    %382 = vmatpush1.msra.mxu0 %v209
    %383 = vmatprep.subr.mxu0 0.0
    %384 = vmatpush1.msra.mxu0 %v210
    %385 = vmatprep.subr.mxu0 0.0
    %386 = vmatpush1.msra.mxu0 %v211
    %387 = vmatprep.subr.mxu0 0.0
    %388 = vmatpush1.msra.mxu0 %v212
    %389 = vmatprep.subr.mxu0 0.0
    %390 = vmatpush1.msra.mxu0 %v213
    %391 = vmatprep.subr.mxu0 0.0
    %392 = vmatpush1.msra.mxu0 0.0
    %393 = vmatprep.subr.mxu0 0.0
    %394 = vmatpush1.msra.mxu0 0.0
    %395 = vmatprep.subr.mxu0 0.0
    %396 = vmatpush1.msra.mxu0 0.0
    %397 = vmatprep.subr.mxu0 0.0
    %398 = vmatpush1.msra.mxu0 0.0
    %399 = vmatprep.subr.mxu0 0.0
    %400 = vmatpush1.msra.mxu0 0.0
    %401 = vmatprep.subr.mxu0 0.0
    %402 = vmatpush1.msra.mxu0 0.0
    %403 = vmatprep.subr.mxu0 0.0
    %404 = vmatpush1.msra.mxu0 0.0
    %405 = vmatprep.subr.mxu0 0.0
    %406 = vmatpush1.msra.mxu0 0.0
    %407 = vmatprep.subr.mxu0 0.0
    %408 = vmatpush1.msra.mxu0 0.0
    %409 = vmatprep.subr.mxu0 0.0
    %410 = vmatpush1.msra.mxu0 0.0
    %411 = vmatprep.subr.mxu0 0.0
    %412 = vmatpush1.msra.mxu0 0.0
    %413 = vmatprep.subr.mxu0 0.0
    %414 = vmatpush1.msra.mxu0 0.0
    %415 = vmatprep.subr.mxu0 0.0
    %416 = vmatpush1.msra.mxu0 0.0
    %417 = vmatprep.subr.mxu0 0.0
    %418 = vmatpush1.msra.mxu0 0.0
    %419 = vmatprep.subr.mxu0 0.0
    %420 = vmatpush1.msra.mxu0 0.0
    %421 = vmatprep.subr.mxu0 0.0
    %422 = vmatpush1.msra.mxu0 0.0
    %423 = vmatprep.mubr.f32.mxu0 0.0
    %424 = vmatmul.mubr.f32.gmra.mrb[0].mxu0 %v358
    %v425 = vpop.f32.mrb[0].mxu0
    %v426 = vadd.f32 0.0, %v425
    %v427 = vpop.f32.mrb[0].mxu0
    %428 = vdwg.mxu0
    %v429 = vadd.f32 %v175, %v426
    %v430 = vtanh.pop %v429
    %431 = vmatprep.subr.mxu0 0.0
    %432 = vmatpush1.msra.mxu0 %v198
    %433 = vmatprep.subr.mxu0 0.0
    %434 = vmatpush1.msra.mxu0 %v199
    %435 = vmatprep.subr.mxu0 0.0
    %436 = vmatpush1.msra.mxu0 %v200
    %437 = vmatprep.subr.mxu0 0.0
    %438 = vmatpush1.msra.mxu0 %v201
    %439 = vmatprep.subr.mxu0 0.0
    %440 = vmatpush1.msra.mxu0 %v202
    %441 = vmatprep.subr.mxu0 0.0
    %442 = vmatpush1.msra.mxu0 %v203
    %443 = vmatprep.subr.mxu0 0.0
    %444 = vmatpush1.msra.mxu0 %v204
    %445 = vmatprep.subr.mxu0 0.0
    %446 = vmatpush1.msra.mxu0 %v205
    %447 = vmatprep.subr.mxu0 0.0
    %448 = vmatpush1.msra.mxu0 %v206
    %449 = vmatprep.subr.mxu0 0.0
    %450 = vmatpush1.msra.mxu0 %v207
    %451 = vmatprep.subr.mxu0 0.0
    %452 = vmatpush1.msra.mxu0 %v208
    %453 = vmatprep.subr.mxu0 0.0
    %454 = vmatpush1.msra.mxu0 %v209
    %455 = vmatprep.subr.mxu0 0.0
    %456 = vmatpush1.msra.mxu0 %v210
    %457 = vmatprep.subr.mxu0 0.0
    %458 = vmatpush1.msra.mxu0 %v211
    %459 = vmatprep.subr.mxu0 0.0
    %460 = vmatpush1.msra.mxu0 %v212
    %461 = vmatprep.subr.mxu0 0.0
    %462 = vmatpush1.msra.mxu0 %v213
    %463 = vmatprep.subr.mxu0 0.0
    %464 = vmatpush1.msra.mxu0 0.0
    %465 = vmatprep.subr.mxu0 0.0
    %466 = vmatpush1.msra.mxu0 0.0
    %467 = vmatprep.subr.mxu0 0.0
    %468 = vmatpush1.msra.mxu0 0.0
    %469 = vmatprep.subr.mxu0 0.0
    %470 = vmatpush1.msra.mxu0 0.0
    %471 = vmatprep.subr.mxu0 0.0
    %472 = vmatpush1.msra.mxu0 0.0
    %473 = vmatprep.subr.mxu0 0.0
    %474 = vmatpush1.msra.mxu0 0.0
    %475 = vmatprep.subr.mxu0 0.0
    %476 = vmatpush1.msra.mxu0 0.0
    %477 = vmatprep.subr.mxu0 0.0
    %478 = vmatpush1.msra.mxu0 0.0
    %479 = vmatprep.subr.mxu0 0.0
    %480 = vmatpush1.msra.mxu0 0.0
    %481 = vmatprep.subr.mxu0 0.0
    %482 = vmatpush1.msra.mxu0 0.0
    %483 = vmatprep.subr.mxu0 0.0
    %484 = vmatpush1.msra.mxu0 0.0
    %485 = vmatprep.subr.mxu0 0.0
    %486 = vmatpush1.msra.mxu0 0.0
    %487 = vmatprep.subr.mxu0 0.0
    %488 = vmatpush1.msra.mxu0 0.0
    %489 = vmatprep.subr.mxu0 0.0
    %490 = vmatpush1.msra.mxu0 0.0
    %491 = vmatprep.subr.mxu0 0.0
    %492 = vmatpush1.msra.mxu0 0.0
    %493 = vmatprep.subr.mxu0 0.0
    %494 = vmatpush1.msra.mxu0 0.0
    %495 = vmatprep.mubr.f32.mxu0 0.0
    %496 = vmatmul.mubr.f32.gmra.mrb[0].mxu0 %v430
    %v497 = vpop.f32.mrb[0].mxu0
    %v498 = vadd.f32 0.0, %v497
    %v499 = vpop.f32.mrb[0].mxu0
    %500 = vdwg.mxu0
    %v501 = vadd.f32 %v180, %v498
    %v502 = vtanh.pop %v501
    %503 = vmatprep.subr.mxu0 0.0
    %504 = vmatpush1.msra.mxu0 %v198
    %505 = vmatprep.subr.mxu0 0.0
    %506 = vmatpush1.msra.mxu0 %v199
    %507 = vmatprep.subr.mxu0 0.0
    %508 = vmatpush1.msra.mxu0 %v200
    %509 = vmatprep.subr.mxu0 0.0
    %510 = vmatpush1.msra.mxu0 %v201
    %511 = vmatprep.subr.mxu0 0.0
    %512 = vmatpush1.msra.mxu0 %v202
    %513 = vmatprep.subr.mxu0 0.0
    %514 = vmatpush1.msra.mxu0 %v203
    %515 = vmatprep.subr.mxu0 0.0
    %516 = vmatpush1.msra.mxu0 %v204
    %517 = vmatprep.subr.mxu0 0.0
    %518 = vmatpush1.msra.mxu0 %v205
    %519 = vmatprep.subr.mxu0 0.0
    %520 = vmatpush1.msra.mxu0 %v206
    %521 = vmatprep.subr.mxu0 0.0
    %522 = vmatpush1.msra.mxu0 %v207
    %523 = vmatprep.subr.mxu0 0.0
    %524 = vmatpush1.msra.mxu0 %v208
    %525 = vmatprep.subr.mxu0 0.0
    %526 = vmatpush1.msra.mxu0 %v209
    %527 = vmatprep.subr.mxu0 0.0
    %528 = vmatpush1.msra.mxu0 %v210
    %529 = vmatprep.subr.mxu0 0.0
    %530 = vmatpush1.msra.mxu0 %v211
    %531 = vmatprep.subr.mxu0 0.0
    %532 = vmatpush1.msra.mxu0 %v212
    %533 = vmatprep.subr.mxu0 0.0
    %534 = vmatpush1.msra.mxu0 %v213
    %535 = vmatprep.subr.mxu0 0.0
    %536 = vmatpush1.msra.mxu0 0.0
    %537 = vmatprep.subr.mxu0 0.0
    %538 = vmatpush1.msra.mxu0 0.0
    %539 = vmatprep.subr.mxu0 0.0
    %540 = vmatpush1.msra.mxu0 0.0
    %541 = vmatprep.subr.mxu0 0.0
    %542 = vmatpush1.msra.mxu0 0.0
    %543 = vmatprep.subr.mxu0 0.0
    %544 = vmatpush1.msra.mxu0 0.0
    %545 = vmatprep.subr.mxu0 0.0
    %546 = vmatpush1.msra.mxu0 0.0
    %547 = vmatprep.subr.mxu0 0.0
    %548 = vmatpush1.msra.mxu0 0.0
    %549 = vmatprep.subr.mxu0 0.0
    %550 = vmatpush1.msra.mxu0 0.0
    %551 = vmatprep.subr.mxu0 0.0
    %552 = vmatpush1.msra.mxu0 0.0
    %553 = vmatprep.subr.mxu0 0.0
    %554 = vmatpush1.msra.mxu0 0.0
    %555 = vmatprep.subr.mxu0 0.0
    %556 = vmatpush1.msra.mxu0 0.0
    %557 = vmatprep.subr.mxu0 0.0
    %558 = vmatpush1.msra.mxu0 0.0
    %559 = vmatprep.subr.mxu0 0.0
    %560 = vmatpush1.msra.mxu0 0.0
    %561 = vmatprep.subr.mxu0 0.0
    %562 = vmatpush1.msra.mxu0 0.0
    %563 = vmatprep.subr.mxu0 0.0
    %564 = vmatpush1.msra.mxu0 0.0
    %565 = vmatprep.subr.mxu0 0.0
    %566 = vmatpush1.msra.mxu0 0.0
    %567 = vmatprep.mubr.f32.mxu0 0.0
    %568 = vmatmul.mubr.f32.gmra.mrb[0].mxu0 %v502
    %v569 = vpop.f32.mrb[0].mxu0
    %v570 = vadd.f32 0.0, %v569
    %v571 = vpop.f32.mrb[0].mxu0
    %572 = vdwg.mxu0
    %v573 = vadd.f32 %v185, %v570
    %v574 = vtanh.pop %v573
    %575 = vmatprep.subr.mxu0 0.0
    %576 = vmatpush1.msra.mxu0 %v198
    %577 = vmatprep.subr.mxu0 0.0
    %578 = vmatpush1.msra.mxu0 %v199
    %579 = vmatprep.subr.mxu0 0.0
    %580 = vmatpush1.msra.mxu0 %v200
    %581 = vmatprep.subr.mxu0 0.0
    %582 = vmatpush1.msra.mxu0 %v201
    %583 = vmatprep.subr.mxu0 0.0
    %584 = vmatpush1.msra.mxu0 %v202
    %585 = vmatprep.subr.mxu0 0.0
    %586 = vmatpush1.msra.mxu0 %v203
    %587 = vmatprep.subr.mxu0 0.0
    %588 = vmatpush1.msra.mxu0 %v204
    %589 = vmatprep.subr.mxu0 0.0
    %590 = vmatpush1.msra.mxu0 %v205
    %591 = vmatprep.subr.mxu0 0.0
    %592 = vmatpush1.msra.mxu0 %v206
    %593 = vmatprep.subr.mxu0 0.0
    %594 = vmatpush1.msra.mxu0 %v207
    %595 = vmatprep.subr.mxu0 0.0
    %596 = vmatpush1.msra.mxu0 %v208
    %597 = vmatprep.subr.mxu0 0.0
    %598 = vmatpush1.msra.mxu0 %v209
    %599 = vmatprep.subr.mxu0 0.0
    %600 = vmatpush1.msra.mxu0 %v210
    %601 = vmatprep.subr.mxu0 0.0
    %602 = vmatpush1.msra.mxu0 %v211
    %603 = vmatprep.subr.mxu0 0.0
    %604 = vmatpush1.msra.mxu0 %v212
    %605 = vmatprep.subr.mxu0 0.0
    %606 = vmatpush1.msra.mxu0 %v213
    %607 = vmatprep.subr.mxu0 0.0
    %608 = vmatpush1.msra.mxu0 0.0
    %609 = vmatprep.subr.mxu0 0.0
    %610 = vmatpush1.msra.mxu0 0.0
    %611 = vmatprep.subr.mxu0 0.0
    %612 = vmatpush1.msra.mxu0 0.0
    %613 = vmatprep.subr.mxu0 0.0
    %614 = vmatpush1.msra.mxu0 0.0
    %615 = vmatprep.subr.mxu0 0.0
    %616 = vmatpush1.msra.mxu0 0.0
    %617 = vmatprep.subr.mxu0 0.0
    %618 = vmatpush1.msra.mxu0 0.0
    %619 = vmatprep.subr.mxu0 0.0
    %620 = vmatpush1.msra.mxu0 0.0
    %621 = vmatprep.subr.mxu0 0.0
    %622 = vmatpush1.msra.mxu0 0.0
    %623 = vmatprep.subr.mxu0 0.0
    %624 = vmatpush1.msra.mxu0 0.0
    %625 = vmatprep.subr.mxu0 0.0
    %626 = vmatpush1.msra.mxu0 0.0
    %627 = vmatprep.subr.mxu0 0.0
    %628 = vmatpush1.msra.mxu0 0.0
    %629 = vmatprep.subr.mxu0 0.0
    %630 = vmatpush1.msra.mxu0 0.0
    %631 = vmatprep.subr.mxu0 0.0
    %632 = vmatpush1.msra.mxu0 0.0
    %633 = vmatprep.subr.mxu0 0.0
    %634 = vmatpush1.msra.mxu0 0.0
    %635 = vmatprep.subr.mxu0 0.0
    %636 = vmatpush1.msra.mxu0 0.0
    %637 = vmatprep.subr.mxu0 0.0
    %638 = vmatpush1.msra.mxu0 0.0
    %639 = vmatprep.mubr.f32.mxu0 0.0
    %640 = vmatmul.mubr.f32.gmra.mrb[0].mxu0 %v574
    %v641 = vpop.f32.mrb[0].mxu0
    %v642 = vadd.f32 0.0, %v641
    %v643 = vpop.f32.mrb[0].mxu0
    %644 = vdwg.mxu0
    %v645 = vadd.f32 %v190, %v642
    %v646 = vtanh.pop %v645
    %647 = vmatprep.subr.mxu0 0.0
    %648 = vmatpush1.msra.mxu0 %v198
    %649 = vmatprep.subr.mxu0 0.0
    %650 = vmatpush1.msra.mxu0 %v199
    %651 = vmatprep.subr.mxu0 0.0
    %652 = vmatpush1.msra.mxu0 %v200
    %653 = vmatprep.subr.mxu0 0.0
    %654 = vmatpush1.msra.mxu0 %v201
    %655 = vmatprep.subr.mxu0 0.0
    %656 = vmatpush1.msra.mxu0 %v202
    %657 = vmatprep.subr.mxu0 0.0
    %658 = vmatpush1.msra.mxu0 %v203
    %659 = vmatprep.subr.mxu0 0.0
    %660 = vmatpush1.msra.mxu0 %v204
    %661 = vmatprep.subr.mxu0 0.0
    %662 = vmatpush1.msra.mxu0 %v205
    %663 = vmatprep.subr.mxu0 0.0
    %664 = vmatpush1.msra.mxu0 %v206
    %665 = vmatprep.subr.mxu0 0.0
    %666 = vmatpush1.msra.mxu0 %v207
    %667 = vmatprep.subr.mxu0 0.0
    %668 = vmatpush1.msra.mxu0 %v208
    %669 = vmatprep.subr.mxu0 0.0
    %670 = vmatpush1.msra.mxu0 %v209
    %671 = vmatprep.subr.mxu0 0.0
    %672 = vmatpush1.msra.mxu0 %v210
    %673 = vmatprep.subr.mxu0 0.0
    %674 = vmatpush1.msra.mxu0 %v211
    %675 = vmatprep.subr.mxu0 0.0
    %676 = vmatpush1.msra.mxu0 %v212
    %677 = vmatprep.subr.mxu0 0.0
    %678 = vmatpush1.msra.mxu0 %v213
    %679 = vmatprep.subr.mxu0 0.0
    %680 = vmatpush1.msra.mxu0 0.0
    %681 = vmatprep.subr.mxu0 0.0
    %682 = vmatpush1.msra.mxu0 0.0
    %683 = vmatprep.subr.mxu0 0.0
    %684 = vmatpush1.msra.mxu0 0.0
    %685 = vmatprep.subr.mxu0 0.0
    %686 = vmatpush1.msra.mxu0 0.0
    %687 = vmatprep.subr.mxu0 0.0
    %688 = vmatpush1.msra.mxu0 0.0
    %689 = vmatprep.subr.mxu0 0.0
    %690 = vmatpush1.msra.mxu0 0.0
    %691 = vmatprep.subr.mxu0 0.0
    %692 = vmatpush1.msra.mxu0 0.0
    %693 = vmatprep.subr.mxu0 0.0
    %694 = vmatpush1.msra.mxu0 0.0
    %695 = vmatprep.subr.mxu0 0.0
    %696 = vmatpush1.msra.mxu0 0.0
    %697 = vmatprep.subr.mxu0 0.0
    %698 = vmatpush1.msra.mxu0 0.0
    %699 = vmatprep.subr.mxu0 0.0
    %700 = vmatpush1.msra.mxu0 0.0
    %701 = vmatprep.subr.mxu0 0.0
    %702 = vmatpush1.msra.mxu0 0.0
    %703 = vmatprep.subr.mxu0 0.0
    %704 = vmatpush1.msra.mxu0 0.0
    %705 = vmatprep.subr.mxu0 0.0
    %706 = vmatpush1.msra.mxu0 0.0
    %707 = vmatprep.subr.mxu0 0.0
    %708 = vmatpush1.msra.mxu0 0.0
    %709 = vmatprep.subr.mxu0 0.0
    %710 = vmatpush1.msra.mxu0 0.0
    %711 = vmatprep.mubr.f32.mxu0 0.0
    %712 = vmatmul.mubr.f32.gmra.mrb[0].mxu0 %v646
    %v713 = vpop.f32.mrb[0].mxu0
    %v714 = vadd.f32 0.0, %v713
    %v715 = vpop.f32.mrb[0].mxu0
    %716 = vdwg.mxu0
    %v717 = vadd.f32 %v195, %v714
    %v718 = vtanh.pop %v717
    %v719 = vld [vmem:[%s4] sm:$0xff]
    %v720 = vld [vmem:[%s4 + $0x8] sm:$0xff]
    %v721 = vld [vmem:[%s4 + $0x10] sm:$0xff]
    %v722 = vld [vmem:[%s4 + $0x18] sm:$0xff]
    %v723 = vld [vmem:[%s4 + $0x20] sm:$0xff]
    %v724 = vld [vmem:[%s4 + $0x28] sm:$0xff]
    %v725 = vld [vmem:[%s4 + $0x30] sm:$0xff]
    %v726 = vld [vmem:[%s4 + $0x38] sm:$0xff]
    %v727 = vld [vmem:[%s4 + $0x40] sm:$0xff]
    %v728 = vld [vmem:[%s4 + $0x48] sm:$0xff]
    %v729 = vld [vmem:[%s4 + $0x50] sm:$0xff]
    %v730 = vld [vmem:[%s4 + $0x58] sm:$0xff]
    %v731 = vld [vmem:[%s4 + $0x60] sm:$0xff]
    %v732 = vld [vmem:[%s4 + $0x68] sm:$0xff]
    %v733 = vld [vmem:[%s4 + $0x70] sm:$0xff]
    %v734 = vld [vmem:[%s4 + $0x78] sm:$0xff]
    %v735 = vld [vmem:[%s5] sm:$0x1]
    %v737 = vlaneseq
    %v738 = vshrl.u32 %v737, 7
    %v739 = vsub.s32 0, %v738
    %v740 = vrot.slane %v735, %v739
    %742 = vmatprep.subr.mxu0 0.0
    %743 = vmatpush1.msra.mxu0 %v719
    %744 = vmatprep.subr.mxu0 0.0
    %745 = vmatpush1.msra.mxu0 %v720
    %746 = vmatprep.subr.mxu0 0.0
    %747 = vmatpush1.msra.mxu0 %v721
    %748 = vmatprep.subr.mxu0 0.0
    %749 = vmatpush1.msra.mxu0 %v722
    %750 = vmatprep.subr.mxu0 0.0
    %751 = vmatpush1.msra.mxu0 %v723
    %752 = vmatprep.subr.mxu0 0.0
    %753 = vmatpush1.msra.mxu0 %v724
    %754 = vmatprep.subr.mxu0 0.0
    %755 = vmatpush1.msra.mxu0 %v725
    %756 = vmatprep.subr.mxu0 0.0
    %757 = vmatpush1.msra.mxu0 %v726
    %758 = vmatprep.subr.mxu0 0.0
    %759 = vmatpush1.msra.mxu0 %v727
    %760 = vmatprep.subr.mxu0 0.0
    %761 = vmatpush1.msra.mxu0 %v728
    %762 = vmatprep.subr.mxu0 0.0
    %763 = vmatpush1.msra.mxu0 %v729
    %764 = vmatprep.subr.mxu0 0.0
    %765 = vmatpush1.msra.mxu0 %v730
    %766 = vmatprep.subr.mxu0 0.0
    %767 = vmatpush1.msra.mxu0 %v731
    %768 = vmatprep.subr.mxu0 0.0
    %769 = vmatpush1.msra.mxu0 %v732
    %770 = vmatprep.subr.mxu0 0.0
    %771 = vmatpush1.msra.mxu0 %v733
    %772 = vmatprep.subr.mxu0 0.0
    %773 = vmatpush1.msra.mxu0 %v734
    %774 = vmatprep.subr.mxu0 0.0
    %775 = vmatpush1.msra.mxu0 0.0
    %776 = vmatprep.subr.mxu0 0.0
    %777 = vmatpush1.msra.mxu0 0.0
    %778 = vmatprep.subr.mxu0 0.0
    %779 = vmatpush1.msra.mxu0 0.0
    %780 = vmatprep.subr.mxu0 0.0
    %781 = vmatpush1.msra.mxu0 0.0
    %782 = vmatprep.subr.mxu0 0.0
    %783 = vmatpush1.msra.mxu0 0.0
    %784 = vmatprep.subr.mxu0 0.0
    %785 = vmatpush1.msra.mxu0 0.0
    %786 = vmatprep.subr.mxu0 0.0
    %787 = vmatpush1.msra.mxu0 0.0
    %788 = vmatprep.subr.mxu0 0.0
    %789 = vmatpush1.msra.mxu0 0.0
    %790 = vmatprep.subr.mxu0 0.0
    %791 = vmatpush1.msra.mxu0 0.0
    %792 = vmatprep.subr.mxu0 0.0
    %793 = vmatpush1.msra.mxu0 0.0
    %794 = vmatprep.subr.mxu0 0.0
    %795 = vmatpush1.msra.mxu0 0.0
    %796 = vmatprep.subr.mxu0 0.0
    %797 = vmatpush1.msra.mxu0 0.0
    %798 = vmatprep.subr.mxu0 0.0
    %799 = vmatpush1.msra.mxu0 0.0
    %800 = vmatprep.subr.mxu0 0.0
    %801 = vmatpush1.msra.mxu0 0.0
    %802 = vmatprep.subr.mxu0 0.0
    %803 = vmatpush1.msra.mxu0 0.0
    %804 = vmatprep.subr.mxu0 0.0
    %805 = vmatpush1.msra.mxu0 0.0
    %806 = vmatprep.mubr.f32.mxu0 0.0
    %807 = vmatmul.mubr.f32.gmra.mrb[0].mxu0 %v718
    %v808 = vpop.f32.mrb[0].mxu0
    %v809 = vadd.f32 %v740, %v808
    %v810 = vpop.f32.mrb[0].mxu0
    %811 = vdwg.mxu0
    %812 = vst [vmem:[%s6] sm:$0xff] %v809
    // Predicated region
    $region38: #{forward.1} parent=1 // pred_check
      _
    $region39: #{forward.1} parent=1 // pred_check_branch
      %814 = sbr.rel (0) target = $region41
    $region40: #{forward.1} parent=1 // pred_region
      _
    $region41: #{forward.1} parent=1 // pred_fallthru
      _
    // Predicated region
    $region42: #{forward.1} parent=1 // pred_check
      _
    $region43: #{forward.1} parent=1 // pred_check_branch
      %816 = sbr.rel (0) target = $region45
    $region44: #{forward.1} parent=1 // pred_region
      _
    $region45: #{forward.1} parent=1 // pred_fallthru
      _
    %817 = vsyncpa [#allocation3], 1
    %818 = vsyncpa [#allocation5], 1

</llo_original>
